<compile_context>
chip_gen: v6e
topology: v6e:2x2x1
jax: 0.10.0
libtpu: 0.0.40
codegen_flags: <defaults>
</compile_context>

<pallas_src>
import functools

import jax
import jax.numpy as jnp
import numpy as np
from jax.experimental import pallas as pl
from jax.experimental.pallas import tpu as pltpu


def _obs_embed_kernel(loc_ref, tgt_ref,                          # scalar prefetch (SMEM)
                      colors_ref, seen_ref, arm_ref, angle_ref,  # VMEM inputs
                      out_ref,                                   # VMEM output (B, dim, HW)
                      *, n_colors, n_arm, dim, W, HW):
    B = out_ref.shape[0]
    c_seen = n_colors
    c_arm = n_colors + 1
    c_loc = c_arm + n_arm
    c_tgt = c_loc + 1
    used = c_tgt + 1

    # ---- whole-batch, lane-dense channel-group stores ------------------------
    out_ref[:, 0:n_colors, :] = colors_ref[...]            # colors  (B, Cc, HW)
    out_ref[:, c_seen:c_arm, :] = seen_ref[...]            # seen    (B, 1, HW)
    if dim > used:                                         # zero padding tail
        out_ref[:, used:dim, :] = jnp.zeros((B, dim - used, HW), jnp.float32)

    # ---- arm / angle_sizes: one divide + one lane-broadcast for the batch ----
    # (B, n_arm, 1) / (B, n_arm, 1) -> broadcast minor dim to HW lanes.
    ratio = arm_ref[...] / angle_ref[...]
    out_ref[:, c_arm:c_loc, :] = jnp.broadcast_to(ratio, (B, n_arm, HW))

    # ---- loc / target one_hot2d planes ----------------------------------------
    # one_hot2d(p)[h, w] == 1 iff h == p[0] and w == p[1]; for in-range indices
    # (required by F.one_hot) that equals a flat-lane-index compare vs p0*W+p1.
    pos = jax.lax.broadcasted_iota(jnp.int32, (1, HW), 1)
    for b in range(B):                                     # B small & static
        loc_flat = loc_ref[b, 0] * W + loc_ref[b, 1]       # SMEM scalar int math
        tgt_flat = tgt_ref[b, 0] * W + tgt_ref[b, 1]
        out_ref[b, c_loc:c_tgt, :] = (pos == loc_flat).astype(jnp.float32)
        out_ref[b, c_tgt:used, :] = (pos == tgt_flat).astype(jnp.float32)


def observation_embedding(colors, seen, arm, loc, target, angle_sizes, dim):
    """Pallas forward of ObservationEmbedding.

    colors:      (B, H, W, Cc)  float32
    seen:        (B, H, W)      float32
    arm:         (B, n_arm)     float32
    loc, target: (B, 2)         int32
    angle_sizes: (n_arm,)       float32
    returns:     (B, dim, H, W) float32   (NCHW, matching the PyTorch module)
    """
    B, H, W, Cc = colors.shape
    n_arm = arm.shape[-1]
    HW = H * W
    assert dim >= Cc + n_arm + 3, "dim must cover all embedded channels"

    # Glue: NHWC -> (B, Cc, H*W) so the kernel stores lane-dense channel slabs.
    colors_f = jnp.transpose(colors, (0, 3, 1, 2)).reshape(B, Cc, HW)
    seen_f = seen.astype(jnp.float32).reshape(B, 1, HW)
    arm_v = arm.astype(jnp.float32).reshape(B, n_arm, 1)
    angle_v = jnp.broadcast_to(
        angle_sizes.astype(jnp.float32).reshape(1, n_arm, 1), (B, n_arm, 1))
    loc = loc.astype(jnp.int32)
    target = target.astype(jnp.int32)

    kernel = functools.partial(_obs_embed_kernel, n_colors=Cc, n_arm=n_arm,
                               dim=dim, W=W, HW=HW)

    grid_spec = pltpu.PrefetchScalarGridSpec(
        num_scalar_prefetch=2,          # loc, target -> SMEM
        grid=(1,),                      # single step: whole batch per invocation
        in_specs=[
            pl.BlockSpec((B, Cc, HW), lambda i, *_: (0, 0, 0)),
            pl.BlockSpec((B, 1, HW), lambda i, *_: (0, 0, 0)),
            pl.BlockSpec((B, n_arm, 1), lambda i, *_: (0, 0, 0)),
            pl.BlockSpec((B, n_arm, 1), lambda i, *_: (0, 0, 0)),
        ],
        out_specs=pl.BlockSpec((B, dim, HW), lambda i, *_: (0, 0, 0)),
    )

    out_bytes = B * dim * HW * 4
    in_bytes = (colors_f.size + seen_f.size + arm_v.size + angle_v.size
                + loc.size + target.size) * 4
    cost = pl.CostEstimate(flops=B * dim * HW, transcendentals=0,
                           bytes_accessed=in_bytes + out_bytes)

    out_flat = pl.pallas_call(
        kernel,
        out_shape=jax.ShapeDtypeStruct((B, dim, HW), jnp.float32),
        grid_spec=grid_spec,
        compiler_params=pltpu.CompilerParams(
            dimension_semantics=("arbitrary",)),
        cost_estimate=cost,
    )(loc, target, colors_f, seen_f, arm_v, angle_v)

    return out_flat.reshape(B, dim, H, W)


def _reference(colors, seen, arm, loc, target, angle_sizes, dim):
    """Pure-JAX re-statement of the PyTorch forward (for validation)."""
    B, H, W, Cc = colors.shape
    n_arm = arm.shape[-1]
    arm_e = jnp.broadcast_to((arm / angle_sizes)[:, None, None, :],
                             (B, H, W, n_arm))
    row = jnp.arange(H)[None, :, None]
    col = jnp.arange(W)[None, None, :]

    def hot(p):
        m = (row == p[:, 0][:, None, None]) & (col == p[:, 1][:, None, None])
        return m.astype(jnp.float32)[..., None]

    x = jnp.concatenate(
        [colors, seen[..., None], arm_e, hot(loc), hot(target)], axis=-1)
    pad = jnp.zeros((B, H, W, dim - x.shape[-1]), x.dtype)
    x = jnp.concatenate([x, pad], axis=-1)
    return jnp.transpose(x, (0, 3, 1, 2))   # (B, dim, H, W), NCHW


if __name__ == "__main__":
    B, H, W, Cc = 2, 16, 16, 3       # box_size = (16, 16), 3 color channels
    n_arm, dim = 8, 32               # 8 arm links, embedding dim 32

    key = jax.random.PRNGKey(0)
    k_col, k_seen, k_arm, k_loc, k_tgt = jax.random.split(key, 5)

    angle_sizes = jnp.array([64, 32, 16, 8, 4, 2, 2, 2], dtype=jnp.float32)

    colors = jax.random.uniform(k_col, (B, H, W, Cc), dtype=jnp.float32)
    seen = jax.random.bernoulli(k_seen, 0.5, (B, H, W)).astype(jnp.float32)
    arm = jax.random.randint(k_arm, (B, n_arm), -16, 17).astype(jnp.float32)
    loc = jax.random.randint(k_loc, (B, 2), 0, 16, dtype=jnp.int32)
    target = jax.random.randint(k_tgt, (B, 2), 0, 16, dtype=jnp.int32)

    out = observation_embedding(colors, seen, arm, loc, target,
                                angle_sizes, dim)
    out = jax.block_until_ready(out)

    ref = _reference(colors, seen, arm, loc, target, angle_sizes, dim)
    np.testing.assert_allclose(np.asarray(out), np.asarray(ref),
                               rtol=1e-6, atol=1e-6)
    print("KERNEL_OK")
</pallas_src>

<mosaic_0001>
module attributes {stable_mosaic.version = 11 : i64} {
  func.func @_obs_embed_kernel(%arg0: i32, %arg1: memref<2x2xi32, #tpu.memory_space<smem>>, %arg2: memref<2x2xi32, #tpu.memory_space<smem>>, %arg3: memref<2x3x256xf32, #tpu.memory_space<vmem>>, %arg4: memref<2x1x256xf32, #tpu.memory_space<vmem>>, %arg5: memref<2x8x1xf32, #tpu.memory_space<vmem>>, %arg6: memref<2x8x1xf32, #tpu.memory_space<vmem>>, %arg7: memref<2x32x256xf32, #tpu.memory_space<vmem>>) attributes {dimension_semantics = [#tpu.dimension_semantics<arbitrary>], iteration_bounds = array<i64: 1>, scalar_prefetch = 2 : i64, scratch_operands = 0 : i64, tpu.core_type = #tpu.core_type<tc>, window_params = [{pipeline_mode = #tpu.pipeline_mode<synchronous>, transform_indices = @transform_0, window_bounds = array<i64: 2, 3, 256>}, {pipeline_mode = #tpu.pipeline_mode<synchronous>, transform_indices = @transform_1, window_bounds = array<i64: 2, 1, 256>}, {pipeline_mode = #tpu.pipeline_mode<synchronous>, transform_indices = @transform_2, window_bounds = array<i64: 2, 8, 1>}, {pipeline_mode = #tpu.pipeline_mode<synchronous>, transform_indices = @transform_3, window_bounds = array<i64: 2, 8, 1>}, {pipeline_mode = #tpu.pipeline_mode<synchronous>, transform_indices = @transform_4, window_bounds = array<i64: 2, 32, 256>}]} {
    %c0 = arith.constant 0 : index
    %c0_0 = arith.constant 0 : index
    %c0_1 = arith.constant 0 : index
    %0 = vector.load %arg3[%c0, %c0_0, %c0_1] : memref<2x3x256xf32, #tpu.memory_space<vmem>>, vector<2x3x256xf32>
    %c0_2 = arith.constant 0 : index
    %c0_3 = arith.constant 0 : index
    %c0_4 = arith.constant 0 : index
    %1 = vector.load %arg7[%c0_2, %c0_3, %c0_4] : memref<2x32x256xf32, #tpu.memory_space<vmem>>, vector<2x3x256xf32>
    tpu.vector_store %arg7[%c0_2, %c0_3, %c0_4], %0 {strides = array<i32>} : memref<2x32x256xf32, #tpu.memory_space<vmem>>, vector<2x3x256xf32>,
    %c0_5 = arith.constant 0 : index
    %c0_6 = arith.constant 0 : index
    %c0_7 = arith.constant 0 : index
    %2 = vector.load %arg4[%c0_5, %c0_6, %c0_7] : memref<2x1x256xf32, #tpu.memory_space<vmem>>, vector<2x1x256xf32>
    %c0_8 = arith.constant 0 : index
    %c3 = arith.constant 3 : index
    %c0_9 = arith.constant 0 : index
    %3 = vector.load %arg7[%c0_8, %c3, %c0_9] : memref<2x32x256xf32, #tpu.memory_space<vmem>>, vector<2x1x256xf32>
    tpu.vector_store %arg7[%c0_8, %c3, %c0_9], %2 {strides = array<i32>} : memref<2x32x256xf32, #tpu.memory_space<vmem>>, vector<2x1x256xf32>,
    %cst = arith.constant 0.000000e+00 : f32
    %4 = vector.broadcast %cst : f32 to vector<2x18x256xf32>
    %c0_10 = arith.constant 0 : index
    %c14 = arith.constant 14 : index
    %c0_11 = arith.constant 0 : index
    %5 = vector.load %arg7[%c0_10, %c14, %c0_11] : memref<2x32x256xf32, #tpu.memory_space<vmem>>, vector<2x18x256xf32>
    tpu.vector_store %arg7[%c0_10, %c14, %c0_11], %4 {strides = array<i32>} : memref<2x32x256xf32, #tpu.memory_space<vmem>>, vector<2x18x256xf32>,
    %c0_12 = arith.constant 0 : index
    %c0_13 = arith.constant 0 : index
    %c0_14 = arith.constant 0 : index
    %6 = vector.load %arg5[%c0_12, %c0_13, %c0_14] : memref<2x8x1xf32, #tpu.memory_space<vmem>>, vector<2x8x1xf32>
    %c0_15 = arith.constant 0 : index
    %c0_16 = arith.constant 0 : index
    %c0_17 = arith.constant 0 : index
    %7 = vector.load %arg6[%c0_15, %c0_16, %c0_17] : memref<2x8x1xf32, #tpu.memory_space<vmem>>, vector<2x8x1xf32>
    %8 = arith.divf %6, %7 : vector<2x8x1xf32>
    %9 = vector.shape_cast %8 : vector<2x8x1xf32> to vector<2x8x1xf32>
    %10 = vector.broadcast %9 : vector<2x8x1xf32> to vector<2x8x256xf32>
    %c0_18 = arith.constant 0 : index
    %c4 = arith.constant 4 : index
    %c0_19 = arith.constant 0 : index
    %11 = vector.load %arg7[%c0_18, %c4, %c0_19] : memref<2x32x256xf32, #tpu.memory_space<vmem>>, vector<2x8x256xf32>
    tpu.vector_store %arg7[%c0_18, %c4, %c0_19], %10 {strides = array<i32>} : memref<2x32x256xf32, #tpu.memory_space<vmem>>, vector<2x8x256xf32>,
    %12 = tpu.iota {dimensions = array<i32: 1>} : vector<1x256xi32>
    %c0_20 = arith.constant 0 : index
    %c0_21 = arith.constant 0 : index
    %13 = memref.load %arg1[%c0_20, %c0_21] : memref<2x2xi32, #tpu.memory_space<smem>>
    %c16_i32 = arith.constant 16 : i32
    %14 = arith.muli %13, %c16_i32 : i32
    %c0_22 = arith.constant 0 : index
    %c1 = arith.constant 1 : index
    %15 = memref.load %arg1[%c0_22, %c1] : memref<2x2xi32, #tpu.memory_space<smem>>
    %16 = arith.addi %14, %15 : i32
    %c0_23 = arith.constant 0 : index
    %c0_24 = arith.constant 0 : index
    %17 = memref.load %arg2[%c0_23, %c0_24] : memref<2x2xi32, #tpu.memory_space<smem>>
    %c16_i32_25 = arith.constant 16 : i32
    %18 = arith.muli %17, %c16_i32_25 : i32
    %c0_26 = arith.constant 0 : index
    %c1_27 = arith.constant 1 : index
    %19 = memref.load %arg2[%c0_26, %c1_27] : memref<2x2xi32, #tpu.memory_space<smem>>
    %20 = arith.addi %18, %19 : i32
    %21 = vector.broadcast %16 : i32 to vector<1x256xi32>
    %22 = arith.cmpi eq, %12, %21 : vector<1x256xi32>
    %23 = arith.extui %22 : vector<1x256xi1> to vector<1x256xi32>
    %24 = arith.sitofp %23 : vector<1x256xi32> to vector<1x256xf32>
    %c0_28 = arith.constant 0 : index
    %c12 = arith.constant 12 : index
    %c0_29 = arith.constant 0 : index
    %25 = vector.load %arg7[%c0_28, %c12, %c0_29] : memref<2x32x256xf32, #tpu.memory_space<vmem>>, vector<1x1x256xf32>
    %26 = vector.shape_cast %25 : vector<1x1x256xf32> to vector<1x256xf32>
    %27 = vector.shape_cast %24 : vector<1x256xf32> to vector<1x1x256xf32>
    tpu.vector_store %arg7[%c0_28, %c12, %c0_29], %27 {strides = array<i32>} : memref<2x32x256xf32, #tpu.memory_space<vmem>>, vector<1x1x256xf32>,
    %28 = vector.broadcast %20 : i32 to vector<1x256xi32>
    %29 = arith.cmpi eq, %12, %28 : vector<1x256xi32>
    %30 = arith.extui %29 : vector<1x256xi1> to vector<1x256xi32>
    %31 = arith.sitofp %30 : vector<1x256xi32> to vector<1x256xf32>
    %c0_30 = arith.constant 0 : index
    %c13 = arith.constant 13 : index
    %c0_31 = arith.constant 0 : index
    %32 = vector.load %arg7[%c0_30, %c13, %c0_31] : memref<2x32x256xf32, #tpu.memory_space<vmem>>, vector<1x1x256xf32>
    %33 = vector.shape_cast %32 : vector<1x1x256xf32> to vector<1x256xf32>
    %34 = vector.shape_cast %31 : vector<1x256xf32> to vector<1x1x256xf32>
    tpu.vector_store %arg7[%c0_30, %c13, %c0_31], %34 {strides = array<i32>} : memref<2x32x256xf32, #tpu.memory_space<vmem>>, vector<1x1x256xf32>,
    %c1_32 = arith.constant 1 : index
    %c0_33 = arith.constant 0 : index
    %35 = memref.load %arg1[%c1_32, %c0_33] : memref<2x2xi32, #tpu.memory_space<smem>>
    %c16_i32_34 = arith.constant 16 : i32
    %36 = arith.muli %35, %c16_i32_34 : i32
    %c1_35 = arith.constant 1 : index
    %c1_36 = arith.constant 1 : index
    %37 = memref.load %arg1[%c1_35, %c1_36] : memref<2x2xi32, #tpu.memory_space<smem>>
    %38 = arith.addi %36, %37 : i32
    %c1_37 = arith.constant 1 : index
    %c0_38 = arith.constant 0 : index
    %39 = memref.load %arg2[%c1_37, %c0_38] : memref<2x2xi32, #tpu.memory_space<smem>>
    %c16_i32_39 = arith.constant 16 : i32
    %40 = arith.muli %39, %c16_i32_39 : i32
    %c1_40 = arith.constant 1 : index
    %c1_41 = arith.constant 1 : index
    %41 = memref.load %arg2[%c1_40, %c1_41] : memref<2x2xi32, #tpu.memory_space<smem>>
    %42 = arith.addi %40, %41 : i32
    %43 = vector.broadcast %38 : i32 to vector<1x256xi32>
    %44 = arith.cmpi eq, %12, %43 : vector<1x256xi32>
    %45 = arith.extui %44 : vector<1x256xi1> to vector<1x256xi32>
    %46 = arith.sitofp %45 : vector<1x256xi32> to vector<1x256xf32>
    %c1_42 = arith.constant 1 : index
    %c12_43 = arith.constant 12 : index
    %c0_44 = arith.constant 0 : index
    %47 = vector.load %arg7[%c1_42, %c12_43, %c0_44] : memref<2x32x256xf32, #tpu.memory_space<vmem>>, vector<1x1x256xf32>
    %48 = vector.shape_cast %47 : vector<1x1x256xf32> to vector<1x256xf32>
    %49 = vector.shape_cast %46 : vector<1x256xf32> to vector<1x1x256xf32>
    tpu.vector_store %arg7[%c1_42, %c12_43, %c0_44], %49 {strides = array<i32>} : memref<2x32x256xf32, #tpu.memory_space<vmem>>, vector<1x1x256xf32>,
    %50 = vector.broadcast %42 : i32 to vector<1x256xi32>
    %51 = arith.cmpi eq, %12, %50 : vector<1x256xi32>
    %52 = arith.extui %51 : vector<1x256xi1> to vector<1x256xi32>
    %53 = arith.sitofp %52 : vector<1x256xi32> to vector<1x256xf32>
    %c1_45 = arith.constant 1 : index
    %c13_46 = arith.constant 13 : index
    %c0_47 = arith.constant 0 : index
    %54 = vector.load %arg7[%c1_45, %c13_46, %c0_47] : memref<2x32x256xf32, #tpu.memory_space<vmem>>, vector<1x1x256xf32>
    %55 = vector.shape_cast %54 : vector<1x1x256xf32> to vector<1x256xf32>
    %56 = vector.shape_cast %53 : vector<1x256xf32> to vector<1x1x256xf32>
    tpu.vector_store %arg7[%c1_45, %c13_46, %c0_47], %56 {strides = array<i32>} : memref<2x32x256xf32, #tpu.memory_space<vmem>>, vector<1x1x256xf32>,
    return
  }
  func.func @transform_0(%arg0: i32, %arg1: memref<2x2xi32, #tpu.memory_space<smem>>, %arg2: memref<2x2xi32, #tpu.memory_space<smem>>) -> (i32, i32, i32) {
    %c0_i32 = arith.constant 0 : i32
    %c0_i32_0 = arith.constant 0 : i32
    %c0_i32_1 = arith.constant 0 : i32
    %c0_i32_2 = arith.constant 0 : i32
    return %c0_i32, %c0_i32_0, %c0_i32_1 : i32, i32, i32
  }
  func.func @transform_1(%arg0: i32, %arg1: memref<2x2xi32, #tpu.memory_space<smem>>, %arg2: memref<2x2xi32, #tpu.memory_space<smem>>) -> (i32, i32, i32) {
    %c0_i32 = arith.constant 0 : i32
    %c0_i32_0 = arith.constant 0 : i32
    %c0_i32_1 = arith.constant 0 : i32
    %c0_i32_2 = arith.constant 0 : i32
    return %c0_i32, %c0_i32_0, %c0_i32_1 : i32, i32, i32
  }
  func.func @transform_2(%arg0: i32, %arg1: memref<2x2xi32, #tpu.memory_space<smem>>, %arg2: memref<2x2xi32, #tpu.memory_space<smem>>) -> (i32, i32, i32) {
    %c0_i32 = arith.constant 0 : i32
    %c0_i32_0 = arith.constant 0 : i32
    %c0_i32_1 = arith.constant 0 : i32
    %c0_i32_2 = arith.constant 0 : i32
    return %c0_i32, %c0_i32_0, %c0_i32_1 : i32, i32, i32
  }
  func.func @transform_3(%arg0: i32, %arg1: memref<2x2xi32, #tpu.memory_space<smem>>, %arg2: memref<2x2xi32, #tpu.memory_space<smem>>) -> (i32, i32, i32) {
    %c0_i32 = arith.constant 0 : i32
    %c0_i32_0 = arith.constant 0 : i32
    %c0_i32_1 = arith.constant 0 : i32
    %c0_i32_2 = arith.constant 0 : i32
    return %c0_i32, %c0_i32_0, %c0_i32_1 : i32, i32, i32
  }
  func.func @transform_4(%arg0: i32, %arg1: memref<2x2xi32, #tpu.memory_space<smem>>, %arg2: memref<2x2xi32, #tpu.memory_space<smem>>) -> (i32, i32, i32) {
    %c0_i32 = arith.constant 0 : i32
    %c0_i32_0 = arith.constant 0 : i32
    %c0_i32_1 = arith.constant 0 : i32
    %c0_i32_2 = arith.constant 0 : i32
    return %c0_i32, %c0_i32_0, %c0_i32_1 : i32, i32, i32
  }
}

</mosaic_0001>

<llo_original>
// kernel: tpu_custom_call.1
$region0: #{tpu_custom_call.1}
  #allocation0 [shape = 'u32[]', space=smem, size = 0x4, offset = 0x4, fixed_abs, tag = 'smem constant byte address 0x4 - core index']
  #allocation1 [shape = 'u32[144,128]{1,0:T(1,128)}', space=vmem, size = 0x12000, scoped, tag = 'internal scratch']
  #allocation2 [shape = 's32[1]{0}', space=sflag, size = 0x4, scoped, tag = 'scoped memory for tpu_custom_call.1']
  #allocation3 [shape = 'u8[1024]{0}', space=smem, size = 0x400, scoped, tag = 'prefetched SMEM operand 0']
  #allocation4 [shape = 'u8[1024]{0}', space=smem, size = 0x400, scoped, tag = 'prefetched SMEM operand 1']
  %s0 = inlined_call_operand.vmem [shape: s32[2,2], index: 0, kind: input, shape index: {}]
  %s1 = inlined_call_operand.vmem [shape: s32[2,2], index: 1, kind: input, shape index: {}]
  %s2 = inlined_call_operand.vmem [shape: f32[2,3,256], index: 2, kind: input, shape index: {}]
  %s3 = inlined_call_operand.vmem [shape: f32[2,1,256], index: 3, kind: input, shape index: {}]
  %s4 = inlined_call_operand.vmem [shape: f32[2,8,1], index: 4, kind: input, shape index: {}]
  %s5 = inlined_call_operand.vmem [shape: f32[2,8,1], index: 5, kind: input, shape index: {}]
  %s6 = inlined_call_operand.hbm [shape: f32[2,32,256], index: 6, kind: output, shape index: {}]
  %s7 = sld [smem:[#allocation0]]
  $region26: #{tpu_custom_call.1} parent=0
    _
  %s9 = ssub.s32 1, %s7
  %s10 = scalar_select 0, %s9, %s7
  %s11 = sshll.u32 %s0, 4
  %s12 = int_to_ptr.vmem [resolvable:$true] %s11
  %14 = dma.vmem_to_smem %s12, 32, [#allocation3], [#allocation2]
  %s15 = sshll.u32 %s1, 4
  %s16 = int_to_ptr.vmem [resolvable:$true] %s15
  %18 = dma.vmem_to_smem %s16, 32, [#allocation4], [#allocation2]
  %19 = dma.done [#allocation2], 64
  %20 = sfence
  $region1: #{tpu_custom_call.1} parent=0
    #allocation5 [shape = 'u8[65536]{0}', space=vmem, size = 0x10000, scoped, tag = 'output window, operand 0, single buffered']
    #allocation6 [shape = 's32[1]{0}', space=sflag, size = 0x4, scoped, tag = 'scoped memory for tpu_custom_call.1']
    %21 = vsyncpa [#allocation6], 0
    // Predicated region
    $region2: #{tpu_custom_call.1} parent=1 // pred_check
      _
    $region3: #{tpu_custom_call.1} parent=1 // pred_check_branch
      %23 = sbr.rel (0) target = $region5
    $region4: #{tpu_custom_call.1} parent=1 // pred_region
      _
    $region5: #{tpu_custom_call.1} parent=1 // pred_fallthru
      _
    // Predicated region
    $region6: #{tpu_custom_call.1} parent=1 // pred_check
      _
    $region7: #{tpu_custom_call.1} parent=1 // pred_check_branch
      %25 = sbr.rel (0) target = $region9
    $region8: #{tpu_custom_call.1} parent=1 // pred_region
      _
    $region9: #{tpu_custom_call.1} parent=1 // pred_fallthru
      _
    // Predicated region
    $region10: #{tpu_custom_call.1} parent=1 // pred_check
      _
    $region11: #{tpu_custom_call.1} parent=1 // pred_check_branch
      %27 = sbr.rel (0) target = $region13
    $region12: #{tpu_custom_call.1} parent=1 // pred_region
      _
    $region13: #{tpu_custom_call.1} parent=1 // pred_fallthru
      _
    // Predicated region
    $region14: #{tpu_custom_call.1} parent=1 // pred_check
      _
    $region15: #{tpu_custom_call.1} parent=1 // pred_check_branch
      %29 = sbr.rel (0) target = $region17
    $region16: #{tpu_custom_call.1} parent=1 // pred_region
      _
    $region17: #{tpu_custom_call.1} parent=1 // pred_fallthru
      _
    %v30 = vld [vmem:[%s2] sm:$0x77]
    %v31 = vld [vmem:[%s2 + $0x8] sm:$0x77]
    %v34 = vcombine.high %v30, %v30
    %v35 = vcombine.high %v31, %v31
    %38 = vst [vmem:[#allocation5] sm:$0x7] %v30
    %39 = vst [vmem:[#allocation5 + $0x8] sm:$0x7] %v34
    %40 = vst [vmem:[#allocation5 + $0x40] sm:$0x7] %v31
    %41 = vst [vmem:[#allocation5 + $0x48] sm:$0x7] %v35
    %v42 = vld [vmem:[%s3] sm:$0x3]
    %v43 = vld [vmem:[%s3 + $0x2] sm:$0x3]
    %v44 = vlaneseq
    %vm45 = vcmp.ge.s32.totalorder %v44, 0
    %vm46 = vcmp.lt.s32.totalorder %v44, 256
    %vm47 = vmand %vm45, %vm46
    %s48 = scalar_lea.vmem [#allocation5], 3
    %49 = vst.msk [vmem:[%s48] ss:$8 sm:$0x3] %vm47, %v42
    %50 = vst.msk [vmem:[%s48] ss:$8 sm:$0x0] %vm47, %v42
    %s51 = scalar_lea.vmem [#allocation5], 67
    %52 = vst.msk [vmem:[%s51] ss:$8 sm:$0x3] %vm47, %v43
    %53 = vst.msk [vmem:[%s51] ss:$8 sm:$0x0] %vm47, %v43
    %54 = vst [vmem:[#allocation5 + $0x10] sm:$0xc0] 0.0
    %55 = vst [vmem:[#allocation5 + $0x18] sm:$0xc0] 0.0
    %56 = vst [vmem:[#allocation5 + $0x20] sm:$0xff] 0.0
    %57 = vst [vmem:[#allocation5 + $0x28] sm:$0xff] 0.0
    %58 = vst [vmem:[#allocation5 + $0x30] sm:$0xff] 0.0
    %59 = vst [vmem:[#allocation5 + $0x38] sm:$0xff] 0.0
    %60 = vst [vmem:[#allocation5 + $0x50] sm:$0xc0] 0.0
    %61 = vst [vmem:[#allocation5 + $0x58] sm:$0xc0] 0.0
    %62 = vst [vmem:[#allocation5 + $0x60] sm:$0xff] 0.0
    %63 = vst [vmem:[#allocation5 + $0x68] sm:$0xff] 0.0
    %64 = vst [vmem:[#allocation5 + $0x70] sm:$0xff] 0.0
    %65 = vst [vmem:[#allocation5 + $0x78] sm:$0xff] 0.0
    %v66 = vld [vmem:[%s4] sm:$0xff]
    %v67 = vld [vmem:[%s4 + $0x8] sm:$0xff]
    %v68 = vld [vmem:[%s5] sm:$0xff]
    %v69 = vld [vmem:[%s5 + $0x8] sm:$0xff]
    %v70 = vrcp.pop %v68
    %v71 = vmul.f32 %v66, %v70
    %v72 = vrcp.pop %v69
    %v73 = vmul.f32 %v67, %v72
    %75 = vset.pattern.permute.xlu0 0
    %76 = vperm.xlu0 %75, %v71
    %v77 = vpop.permute.xlu0 %76
    %79 = vset.pattern.permute.xlu0 0
    %80 = vperm.xlu0 %79, %v73
    %v81 = vpop.permute.xlu0 %80
    %v82 = vrot.slane %v77, 4
    %v83 = vrot.slane %v81, 4
    %86 = vst [vmem:[#allocation5] sm:$0xf0] %v82
    %87 = vst [vmem:[#allocation5 + $0x8] sm:$0xf0] %v82
    %88 = vst [vmem:[#allocation5 + $0x10] sm:$0xf] %v82
    %89 = vst [vmem:[#allocation5 + $0x18] sm:$0xf] %v82
    %90 = vst [vmem:[#allocation5 + $0x40] sm:$0xf0] %v83
    %91 = vst [vmem:[#allocation5 + $0x48] sm:$0xf0] %v83
    %92 = vst [vmem:[#allocation5 + $0x50] sm:$0xf] %v83
    %93 = vst [vmem:[#allocation5 + $0x58] sm:$0xf] %v83
    %v94 = vlaneseq
    %v95 = vand.u32 %v94, 127
    %v96 = vadd.s32 %v95, 128
    %s97 = sld [smem:[#allocation3]]
    %s98 = smul.u32 %s97, 16
    %s99 = sld [smem:[#allocation3 + $0x1]]
    %s100 = sadd.s32 %s98, %s99
    %s101 = sld [smem:[#allocation4]]
    %s102 = smul.u32 %s101, 16
    %s103 = sld [smem:[#allocation4 + $0x1]]
    %s104 = sadd.s32 %s102, %s103
    %v105 = vstv %s100
    %vm106 = vcmp.eq.s32.totalorder %v95, %v105
    %vm107 = vcmp.eq.s32.totalorder %v96, %v105
    %v108 = vsel %vm106, 1, 0
    %v109 = vsel %vm107, 1, 0
    %v110 = vcvt.s32.f32 %v108
    %v111 = vcvt.s32.f32 %v109
    %v114 = vcombine.low %v110, %v111
    %v116 = vunpack.c.l.s4 1966171168
    %v117 = vunpack.c.0.s8 %v116
    %v118 = vlaneseq
    %v119 = vshrl.u32 %v118, 7
    %v120 = vsub.s32 %v117, %v119
    %v121 = vrot.slane %v114, %v120
    %v123 = vunpack.c.l.s4 1966171168
    %v124 = vunpack.c.0.s8 %v123
    %v125 = vlaneseq
    %v126 = vshrl.u32 %v125, 7
    %v127 = vsub.s32 %v124, %v126
    %v128 = vrot.slane %v121, %v127
    %s130 = scalar_lea.vmem [#allocation5], 20
    %131 = vst.msk [vmem:[%s130] ss:$8 sm:$0x3] %vm47, %v128
    %132 = vst.msk [vmem:[%s130] ss:$8 sm:$0x0] %vm47, %v128
    %v133 = vstv %s104
    %vm134 = vcmp.eq.s32.totalorder %v95, %v133
    %vm135 = vcmp.eq.s32.totalorder %v96, %v133
    %v136 = vsel %vm134, 1, 0
    %v137 = vsel %vm135, 1, 0
    %v138 = vcvt.s32.f32 %v136
    %v139 = vcvt.s32.f32 %v137
    %v142 = vcombine.low %v138, %v139
    %v144 = vunpack.c.l.s4 1966171168
    %v145 = vunpack.c.0.s8 %v144
    %v146 = vlaneseq
    %v147 = vshrl.u32 %v146, 7
    %v148 = vsub.s32 %v145, %v147
    %v149 = vrot.slane %v142, %v148
    %v151 = vunpack.c.l.s4 1966171168
    %v152 = vunpack.c.0.s8 %v151
    %v153 = vlaneseq
    %v154 = vshrl.u32 %v153, 7
    %v155 = vsub.s32 %v152, %v154
    %v156 = vrot.slane %v149, %v155
    %s158 = scalar_lea.vmem [#allocation5], 21
    %159 = vst.msk [vmem:[%s158] ss:$8 sm:$0x3] %vm47, %v156
    %160 = vst.msk [vmem:[%s158] ss:$8 sm:$0x0] %vm47, %v156
    %s161 = sld [smem:[#allocation3 + $0x80]]
    %s162 = smul.u32 %s161, 16
    %s163 = sld [smem:[#allocation3 + $0x81]]
    %s164 = sadd.s32 %s162, %s163
    %s165 = sld [smem:[#allocation4 + $0x80]]
    %s166 = smul.u32 %s165, 16
    %s167 = sld [smem:[#allocation4 + $0x81]]
    %s168 = sadd.s32 %s166, %s167
    %v169 = vstv %s164
    %vm170 = vcmp.eq.s32.totalorder %v95, %v169
    %vm171 = vcmp.eq.s32.totalorder %v96, %v169
    %v172 = vsel %vm170, 1, 0
    %v173 = vsel %vm171, 1, 0
    %v174 = vcvt.s32.f32 %v172
    %v175 = vcvt.s32.f32 %v173
    %v178 = vcombine.low %v174, %v175
    %v180 = vunpack.c.l.s4 1966171168
    %v181 = vunpack.c.0.s8 %v180
    %v182 = vlaneseq
    %v183 = vshrl.u32 %v182, 7
    %v184 = vsub.s32 %v181, %v183
    %v185 = vrot.slane %v178, %v184
    %v187 = vunpack.c.l.s4 1966171168
    %v188 = vunpack.c.0.s8 %v187
    %v189 = vlaneseq
    %v190 = vshrl.u32 %v189, 7
    %v191 = vsub.s32 %v188, %v190
    %v192 = vrot.slane %v185, %v191
    %s194 = scalar_lea.vmem [#allocation5], 64
    %s195 = scalar_lea.vmem %s194, 20 [#allocation5]
    %196 = vst.msk [vmem:[%s195] ss:$8 sm:$0x3] %vm47, %v192
    %197 = vst.msk [vmem:[%s195] ss:$8 sm:$0x0] %vm47, %v192
    %v198 = vstv %s168
    %vm199 = vcmp.eq.s32.totalorder %v95, %v198
    %vm200 = vcmp.eq.s32.totalorder %v96, %v198
    %v201 = vsel %vm199, 1, 0
    %v202 = vsel %vm200, 1, 0
    %v203 = vcvt.s32.f32 %v201
    %v204 = vcvt.s32.f32 %v202
    %v207 = vcombine.low %v203, %v204
    %v209 = vunpack.c.l.s4 1966171168
    %v210 = vunpack.c.0.s8 %v209
    %v211 = vlaneseq
    %v212 = vshrl.u32 %v211, 7
    %v213 = vsub.s32 %v210, %v212
    %v214 = vrot.slane %v207, %v213
    %v216 = vunpack.c.l.s4 1966171168
    %v217 = vunpack.c.0.s8 %v216
    %v218 = vlaneseq
    %v219 = vshrl.u32 %v218, 7
    %v220 = vsub.s32 %v217, %v219
    %v221 = vrot.slane %v214, %v220
    %s223 = scalar_lea.vmem %s194, 21 [#allocation5]
    %224 = vst.msk [vmem:[%s223] ss:$8 sm:$0x3] %vm47, %v221
    %225 = vst.msk [vmem:[%s223] ss:$8 sm:$0x0] %vm47, %v221
    // Predicated region
    $region18: #{tpu_custom_call.1} parent=1 // pred_check
      _
    $region19: #{tpu_custom_call.1} parent=1 // pred_check_branch
      %227 = sbr.rel (0) target = $region21
    $region20: #{tpu_custom_call.1} parent=1 // pred_region
      %s229 = ssub.s32 2048, 2048
      %230 = vsyncadd [#allocation6], %s229
      %s231 = sshll.u32 [#allocation5], 4
      %s232 = int_to_ptr.vmem [resolvable:$true] %s231
      %237 = dma.vmem_to_hbm [thread:$0]  %s232, 2048, %s6, [#allocation6], 256, 256, 16
    $region21: #{tpu_custom_call.1} parent=1 // pred_fallthru
      _
    // Predicated region
    $region22: #{tpu_custom_call.1} parent=1 // pred_check
      _
    $region23: #{tpu_custom_call.1} parent=1 // pred_check_branch
      %239 = sbr.rel (0) target = $region25
    $region24: #{tpu_custom_call.1} parent=1 // pred_region
      %240 = dma.done [#allocation6], 2048
    $region25: #{tpu_custom_call.1} parent=1 // pred_fallthru
      _
    %241 = vsyncpa [#allocation6], 1

</llo_original>
